<compile_context>
chip_gen: v7x
topology: tpu7x:2x2x1
jax: 0.10.0
libtpu: 0.0.40
codegen_flags: <defaults>
</compile_context>

<pallas_src>
import jax
import jax.numpy as jnp
from jax.experimental import pallas as pl
from jax.experimental.pallas import tpu as pltpu


def _round_up(x, m):
    return (x + m - 1) // m * m


def _object_valid_kernel(x_ref, w1_ref, b1_ref, w2_ref, b2_ref, o_ref):
    # x_ref:  (TM, D)  activation rows (row-major -> one contiguous DMA per step)
    # w1_ref: (D, H)   first linear weight (resident across grid steps)
    # b1_ref: (1, H)   first linear bias
    # w2_ref: (1, H)   second linear weight as a row
    # b2_ref: (1,)     scalar bias in SMEM
    # o_ref:  (TM, 1)  logits
    h = jnp.dot(x_ref[...], w1_ref[...], preferred_element_type=jnp.float32)
    h = h + b1_ref[...]
    # SiLU in f32 (EUP sigmoid, VPU multiply).
    h = h * jax.nn.sigmoid(h)
    # Second linear ((H,) -> scalar per row) as VPU broadcast-mul + XLU lane reduce;
    # an (H,1) MXU matmul would waste almost the entire systolic-array width.
    logit = jnp.sum(h * w2_ref[...], axis=-1, keepdims=True) + b2_ref[0]
    o_ref[...] = logit.astype(o_ref.dtype)


def object_valid_forward(x_embed, params, *, tm=2048, compute_dtype=jnp.float32):
    """x_embed: (B, N, D). Returns (B, N) float32 logits.

    tm: row tile (rounded to a multiple of 128; sweep 2048-8192 for large B*N).
    compute_dtype=jnp.bfloat16 halves the dominant x read stream; ideally the
    producer of x_embed emits bf16 directly so the cast is not a separate HBM pass.
    """
    B, N, D = x_embed.shape
    w1, b1, w2, b2 = params["w1"], params["b1"], params["w2"], params["b2"]
    H = w1.shape[1]
    M = B * N
    in_itemsize = jnp.dtype(compute_dtype).itemsize

    # --- tile-size selection -------------------------------------------------
    tm = _round_up(max(tm, 128), 128)
    tm_eff = min(tm, _round_up(M, 128))            # never larger than the problem
    if M >= 256:
        # Keep both v7x TensorCores busy: aim for >= 2 grid steps.
        tm_eff = min(tm_eff, _round_up(pl.cdiv(M, 2), 128))
    # Stay well inside v5e's 16 MiB default scoped VMEM (x is double-buffered).
    vmem_budget = 8 * 1024 * 1024
    max_tm_vmem = max(128, (vmem_budget // (2 * D * in_itemsize)) // 128 * 128)
    tm_eff = min(tm_eff, max_tm_vmem)
    grid = pl.cdiv(M, tm_eff)                      # ragged M handled by clipping

    # --- layout plumbing (no transpose, no pad, no extra HBM pass for f32) ----
    x2d = x_embed.reshape(M, D)
    w1m = w1
    if compute_dtype != jnp.float32:
        # TODO(synk): emit compute_dtype from the x_embed producer instead of
        # casting here (the wrapper cast is its own HBM pass on the big stream).
        x2d = x2d.astype(compute_dtype)
        w1m = w1m.astype(compute_dtype)
    b1r = b1.reshape(1, H).astype(jnp.float32)
    w2r = w2.reshape(1, H).astype(jnp.float32)
    b2s = b2.reshape(1).astype(jnp.float32)

    cost = pl.CostEstimate(
        flops=2 * M * D * H + 3 * M * H,
        transcendentals=M * H,
        bytes_accessed=M * D * in_itemsize + M * 4
        + D * H * in_itemsize + 2 * H * 4 + 4,
    )

    logits = pl.pallas_call(
        _object_valid_kernel,
        out_shape=jax.ShapeDtypeStruct((M, 1), jnp.float32),
        grid_spec=pltpu.PrefetchScalarGridSpec(
            num_scalar_prefetch=0,
            grid=(grid,),
            in_specs=[
                pl.BlockSpec((tm_eff, D), lambda i: (i, 0)),        # x tile (contiguous)
                pl.BlockSpec((D, H), lambda i: (0, 0)),             # W1 (resident)
                pl.BlockSpec((1, H), lambda i: (0, 0)),             # b1
                pl.BlockSpec((1, H), lambda i: (0, 0)),             # w2 row
                pl.BlockSpec(memory_space=pltpu.MemorySpace.SMEM),  # b2 scalar
            ],
            out_specs=pl.BlockSpec((tm_eff, 1), lambda i: (i, 0)),
        ),
        compiler_params=pltpu.CompilerParams(
            dimension_semantics=("parallel",),   # v7x shards the row grid over both TCs
        ),
        cost_estimate=cost,
    )(x2d, w1m, b1r, w2r, b2s)

    # Matches the torch .squeeze(-1).
    return logits[:, 0].reshape(B, N)


class ObjectValidTaskPallas:
    """Minimal JAX mirror of ObjectValidTask.forward."""

    def __init__(self, name, input_object, output_object, dim, key):
        self.name = name
        self.input_object = input_object
        self.output_object = output_object
        self.dim = dim
        hidden = 2 * dim  # Dense(dim, 1): hidden_dim_scale = 2 (documented assumption)
        k1, k2, k3, k4 = jax.random.split(key, 4)
        # Deterministic synthetic init (not a checkpoint).
        self.params = {
            "w1": jax.random.normal(k1, (dim, hidden), jnp.float32) * (1.0 / jnp.sqrt(dim)),
            "b1": jax.random.normal(k2, (1, hidden), jnp.float32) * 0.01,
            "w2": jax.random.normal(k3, (hidden, 1), jnp.float32) * (1.0 / jnp.sqrt(hidden)),
            "b2": jax.random.normal(k4, (1, 1), jnp.float32) * 0.01,
        }

    def forward(self, x: dict) -> dict:
        x_embed = x[self.input_object + "_embed"]
        x_logit = object_valid_forward(x_embed, self.params)
        return {self.output_object + "_logit": x_logit}


def _reference_forward(x_embed, params):
    h = x_embed @ params["w1"] + params["b1"][0]
    h = h * jax.nn.sigmoid(h)
    return (h @ params["w2"] + params["b2"][0, 0])[..., 0]


if __name__ == "__main__":
    key = jax.random.PRNGKey(0)
    k_param, k_x = jax.random.split(key)

    B, N, D = 2, 256, 32  # batch, num object queries, embed dim -> M=512, grid=2
    task = ObjectValidTaskPallas(
        name="track_valid",
        input_object="query",
        output_object="track",
        dim=D,
        key=k_param,
    )

    x = {"query_embed": jax.random.normal(k_x, (B, N, D), jnp.float32)}

    out = task.forward(x)
    logits = out["track_logit"]
    jax.block_until_ready(logits)
    assert logits.shape == (B, N), logits.shape

    ref = _reference_forward(x["query_embed"], task.params)
    assert jnp.allclose(logits, ref, atol=1e-3, rtol=1e-3), "mismatch vs JAX reference (f32)"

    # Ragged-M path (B*N not a multiple of 128): cdiv grid + boundary clipping, no pad.
    xr = jax.random.normal(k_x, (1, 100, D), jnp.float32)
    ragged = object_valid_forward(xr, task.params)
    jax.block_until_ready(ragged)
    assert ragged.shape == (1, 100)
    assert jnp.allclose(ragged, _reference_forward(xr, task.params), atol=1e-3, rtol=1e-3), \
        "mismatch vs JAX reference (ragged)"

    # bf16 bandwidth-lever path (x + w1 in bf16, f32 MXU accumulation) — tolerance check.
    logits_bf16 = object_valid_forward(
        x["query_embed"], task.params, compute_dtype=jnp.bfloat16
    )
    jax.block_until_ready(logits_bf16)
    assert jnp.allclose(logits_bf16, ref, atol=1e-1, rtol=1e-1), "mismatch vs JAX reference (bf16)"

    print("KERNEL_OK")
</pallas_src>

<mosaic_0001>
module attributes {stable_mosaic.version = 11 : i64} {
  func.func @_object_valid_kernel(%arg0: i32, %arg1: memref<256x32xf32, #tpu.memory_space<vmem>>, %arg2: memref<32x64xf32, #tpu.memory_space<vmem>>, %arg3: memref<1x64xf32, #tpu.memory_space<vmem>>, %arg4: memref<1x64xf32, #tpu.memory_space<vmem>>, %arg5: memref<1xf32, #tpu.memory_space<smem>>, %arg6: memref<256x1xf32, #tpu.memory_space<vmem>>) attributes {dimension_semantics = [#tpu.dimension_semantics<parallel>], iteration_bounds = array<i64: 2>, scalar_prefetch = 0 : i64, scratch_operands = 0 : i64, tpu.core_type = #tpu.core_type<tc>, window_params = [{transform_indices = @transform_0, window_bounds = array<i64: 256, 32>}, {pipeline_mode = #tpu.pipeline_mode<synchronous>, transform_indices = @transform_1, window_bounds = array<i64: 32, 64>}, {pipeline_mode = #tpu.pipeline_mode<synchronous>, transform_indices = @transform_2, window_bounds = array<i64: 1, 64>}, {pipeline_mode = #tpu.pipeline_mode<synchronous>, transform_indices = @transform_3, window_bounds = array<i64: 1, 64>}, {transform_indices = @transform_4, window_bounds = array<i64: 1>}, {transform_indices = @transform_5, window_bounds = array<i64: 256, 1>}]} {
    %c0 = arith.constant 0 : index
    %c0_0 = arith.constant 0 : index
    %0 = vector.load %arg1[%c0, %c0_0] : memref<256x32xf32, #tpu.memory_space<vmem>>, vector<256x32xf32>
    %c0_1 = arith.constant 0 : index
    %c0_2 = arith.constant 0 : index
    %1 = vector.load %arg2[%c0_1, %c0_2] : memref<32x64xf32, #tpu.memory_space<vmem>>, vector<32x64xf32>
    %cst = arith.constant dense<0.000000e+00> : vector<256x64xf32>
    %2 = tpu.matmul %0, %1, %cst {dimension_numbers = #tpu.dot_dimension_numbers<[1], [0], [0], [1], [0, 0, 1, 1], [], []>} : vector<256x32xf32>, vector<32x64xf32>, vector<256x64xf32> -> vector<256x64xf32>
    %c0_3 = arith.constant 0 : index
    %c0_4 = arith.constant 0 : index
    %3 = vector.load %arg3[%c0_3, %c0_4] : memref<1x64xf32, #tpu.memory_space<vmem>>, vector<1x64xf32>
    %4 = vector.broadcast %3 : vector<1x64xf32> to vector<256x64xf32>
    %5 = arith.addf %2, %4 : vector<256x64xf32>
    %6 = arith.negf %5 : vector<256x64xf32>
    %7 = math.exp %6 : vector<256x64xf32>
    %cst_5 = arith.constant 1.000000e+00 : f32
    %8 = vector.broadcast %cst_5 : f32 to vector<256x64xf32>
    %9 = arith.addf %8, %7 : vector<256x64xf32>
    %10 = arith.divf %8, %9 : vector<256x64xf32>
    %11 = arith.mulf %5, %10 : vector<256x64xf32>
    %c0_6 = arith.constant 0 : index
    %c0_7 = arith.constant 0 : index
    %12 = vector.load %arg4[%c0_6, %c0_7] : memref<1x64xf32, #tpu.memory_space<vmem>>, vector<1x64xf32>
    %13 = vector.broadcast %12 : vector<1x64xf32> to vector<256x64xf32>
    %14 = arith.mulf %11, %13 : vector<256x64xf32>
    %cst_8 = arith.constant dense<0.000000e+00> : vector<256xf32>
    %15 = vector.multi_reduction <add>, %14, %cst_8 [1] : vector<256x64xf32> to vector<256xf32>
    %16 = vector.shape_cast %15 : vector<256xf32> to vector<256x1xf32>
    %c0_9 = arith.constant 0 : index
    %17 = memref.load %arg5[%c0_9] : memref<1xf32, #tpu.memory_space<smem>>
    %18 = vector.broadcast %17 : f32 to vector<256x1xf32>
    %19 = arith.addf %16, %18 : vector<256x1xf32>
    %c0_10 = arith.constant 0 : index
    %c0_11 = arith.constant 0 : index
    %20 = vector.load %arg6[%c0_10, %c0_11] : memref<256x1xf32, #tpu.memory_space<vmem>>, vector<256x1xf32>
    tpu.vector_store %arg6[%c0_10, %c0_11], %19 {strides = array<i32>} : memref<256x1xf32, #tpu.memory_space<vmem>>, vector<256x1xf32>,
    return
  }
  func.func @transform_0(%arg0: i32) -> (i32, i32) {
    %c0_i32 = arith.constant 0 : i32
    %c0_i32_0 = arith.constant 0 : i32
    return %arg0, %c0_i32 : i32, i32
  }
  func.func @transform_1(%arg0: i32) -> (i32, i32) {
    %c0_i32 = arith.constant 0 : i32
    %c0_i32_0 = arith.constant 0 : i32
    %c0_i32_1 = arith.constant 0 : i32
    return %c0_i32, %c0_i32_0 : i32, i32
  }
  func.func @transform_2(%arg0: i32) -> (i32, i32) {
    %c0_i32 = arith.constant 0 : i32
    %c0_i32_0 = arith.constant 0 : i32
    %c0_i32_1 = arith.constant 0 : i32
    return %c0_i32, %c0_i32_0 : i32, i32
  }
  func.func @transform_3(%arg0: i32) -> (i32, i32) {
    %c0_i32 = arith.constant 0 : i32
    %c0_i32_0 = arith.constant 0 : i32
    %c0_i32_1 = arith.constant 0 : i32
    return %c0_i32, %c0_i32_0 : i32, i32
  }
  func.func @transform_4(%arg0: i32) -> i32 {
    %c0_i32 = arith.constant 0 : i32
    %c0_i32_0 = arith.constant 0 : i32
    return %c0_i32 : i32
  }
  func.func @transform_5(%arg0: i32) -> (i32, i32) {
    %c0_i32 = arith.constant 0 : i32
    %c0_i32_0 = arith.constant 0 : i32
    return %arg0, %c0_i32 : i32, i32
  }
}

</mosaic_0001>

<llo_original>
// kernel: tpu_custom_call.1
$region0: #{tpu_custom_call.1}
  #allocation0 [shape = 'u32[]', space=smem, size = 0x4, offset = 0x4, fixed_abs, tag = 'smem constant byte address 0x4 - core index']
  #allocation1 [shape = 'u32[144,128]{1,0:T(1,128)}', space=vmem, size = 0x12000, scoped, tag = 'internal scratch']
  #allocation2 [shape = 'f32[1]{0:T(128)S(6)}', space=smem, size = 0x200, scoped, tag = 'scoped memory for tpu_custom_call.1']
  %s0 = inlined_call_operand.vmem [shape: f32[512,32], index: 0, kind: input, shape index: {}]
  %s1 = inlined_call_operand.vmem [shape: f32[32,64], index: 1, kind: input, shape index: {}]
  %s2 = inlined_call_operand.vmem [shape: f32[1,64], index: 2, kind: input, shape index: {}]
  %s3 = inlined_call_operand.vmem [shape: f32[1,64], index: 3, kind: input, shape index: {}]
  %s4 = inlined_call_operand.<no memory space> [shape: f32[1], index: 4, kind: input, shape index: {}]
  %s5 = inlined_call_operand.vmem [shape: f32[512,1], index: 5, kind: output, shape index: {}]
  %s6 = sld [smem:[#allocation0]]
  $region53: #{tpu_custom_call.1} parent=0
    _
  %s8 = ssub.s32 1, %s6
  %s9 = scalar_select 0, %s8, %s6
  %10 = sst [smem:[#allocation2]] %s4
  loop: start=0, step=1, limit=4
  $region2: #{tpu_custom_call.1} parent=0 // loop_pre_header
    _
  $region3: #{tpu_custom_call.1} parent=0 // loop_header
    %s12 = sphi 0, %s16
    %p13 = scmp.ge.s32.totalorder %s12, 4
    %s22 = sphi 0, %s24
    %s25 = sphi 0, %s22
    %s26 = sphi 0, %s25
    %s42 = sphi 0, %s26
    %s46 = sphi 0, %s46
    %s48 = sphi 0, %s46
    %s49 = sphi 0, %s48
    %s63 = sphi 0, %s49
    %s67 = sphi 0, %s67
    %s69 = sphi 0, %s67
    %s70 = sphi 0, %s69
    %s84 = sphi 0, %s70
    %s88 = sphi 0, %s88
    %s90 = sphi 0, %s88
    %s91 = sphi 0, %s90
    %s105 = sphi 0, %s91
    %s109 = sphi 0, %s109
    %s111 = sphi 0, %s109
    %s112 = sphi 0, %s111
    %s126 = sphi 0, %s112
    %s132 = sphi 0, %s134
    %s135 = sphi 0, %s132
    %s136 = sphi 0, %s135
    %s152 = sphi 0, %s136
  $region4: #{tpu_custom_call.1} parent=0 // loop_header_branch
    %15 = sbr.rel (%p13) target = $region8
  $region5: #{tpu_custom_call.1} parent=0 // loop_body
    %s17 = ssub.s32 %s12, 1
    %s18 = ssub.s32 %s12, 2
    %s19 = sadd.s32 %s12, 1
    %s20 = ssub.s32 %s12, %s19
    %p21 = scmp.eq.s32.totalorder %s20, 0
    %s23 = sadd.s32 %s22, 1
    %s24 = scalar_select %p21, %s22, %s23
    %p27 = pneg %p21
    %p28 = scmp.eq.s32.totalorder %s12, 1
    %p29 = por %p27, %p28
    %p30 = scmp.ne.s32.totalorder %s22, %s25
    %p31 = scmp.eq.s32.totalorder %s12, 0
    %p32 = por %p30, %p31
    %p33 = scmp.ne.s32.totalorder %s22, %s25
    %p34 = scmp.eq.s32.totalorder %s17, 1
    %p35 = por %p33, %p34
    %p36 = scmp.ne.s32.totalorder %s25, %s26
    %p37 = scmp.eq.s32.totalorder %s17, 0
    %p38 = por %p36, %p37
    %p39 = scmp.ne.s32.totalorder %s25, %s26
    %p40 = scmp.eq.s32.totalorder %s18, 1
    %p41 = por %p39, %p40
    %p43 = scmp.ne.s32.totalorder %s26, %s42
    %p44 = scmp.eq.s32.totalorder %s18, 0
    %p45 = por %p43, %p44
    %s47 = sadd.s32 %s46, 1
    %p50 = scmp.eq.s32.totalorder %s12, 1
    %p51 = scmp.ne.s32.totalorder %s46, %s48
    %p52 = scmp.eq.s32.totalorder %s12, 0
    %p53 = por %p51, %p52
    %p54 = scmp.ne.s32.totalorder %s46, %s48
    %p55 = scmp.eq.s32.totalorder %s17, 1
    %p56 = por %p54, %p55
    %p57 = scmp.ne.s32.totalorder %s48, %s49
    %p58 = scmp.eq.s32.totalorder %s17, 0
    %p59 = por %p57, %p58
    %p60 = scmp.ne.s32.totalorder %s48, %s49
    %p61 = scmp.eq.s32.totalorder %s18, 1
    %p62 = por %p60, %p61
    %p64 = scmp.ne.s32.totalorder %s49, %s63
    %p65 = scmp.eq.s32.totalorder %s18, 0
    %p66 = por %p64, %p65
    %s68 = sadd.s32 %s67, 1
    %p71 = scmp.eq.s32.totalorder %s12, 1
    %p72 = scmp.ne.s32.totalorder %s67, %s69
    %p73 = scmp.eq.s32.totalorder %s12, 0
    %p74 = por %p72, %p73
    %p75 = scmp.ne.s32.totalorder %s67, %s69
    %p76 = scmp.eq.s32.totalorder %s17, 1
    %p77 = por %p75, %p76
    %p78 = scmp.ne.s32.totalorder %s69, %s70
    %p79 = scmp.eq.s32.totalorder %s17, 0
    %p80 = por %p78, %p79
    %p81 = scmp.ne.s32.totalorder %s69, %s70
    %p82 = scmp.eq.s32.totalorder %s18, 1
    %p83 = por %p81, %p82
    %p85 = scmp.ne.s32.totalorder %s70, %s84
    %p86 = scmp.eq.s32.totalorder %s18, 0
    %p87 = por %p85, %p86
    %s89 = sadd.s32 %s88, 1
    %p92 = scmp.eq.s32.totalorder %s12, 1
    %p93 = scmp.ne.s32.totalorder %s88, %s90
    %p94 = scmp.eq.s32.totalorder %s12, 0
    %p95 = por %p93, %p94
    %p96 = scmp.ne.s32.totalorder %s88, %s90
    %p97 = scmp.eq.s32.totalorder %s17, 1
    %p98 = por %p96, %p97
    %p99 = scmp.ne.s32.totalorder %s90, %s91
    %p100 = scmp.eq.s32.totalorder %s17, 0
    %p101 = por %p99, %p100
    %p102 = scmp.ne.s32.totalorder %s90, %s91
    %p103 = scmp.eq.s32.totalorder %s18, 1
    %p104 = por %p102, %p103
    %p106 = scmp.ne.s32.totalorder %s91, %s105
    %p107 = scmp.eq.s32.totalorder %s18, 0
    %p108 = por %p106, %p107
    %s110 = sadd.s32 %s109, 1
    %p113 = scmp.eq.s32.totalorder %s12, 1
    %p114 = scmp.ne.s32.totalorder %s109, %s111
    %p115 = scmp.eq.s32.totalorder %s12, 0
    %p116 = por %p114, %p115
    %p117 = scmp.ne.s32.totalorder %s109, %s111
    %p118 = scmp.eq.s32.totalorder %s17, 1
    %p119 = por %p117, %p118
    %p120 = scmp.ne.s32.totalorder %s111, %s112
    %p121 = scmp.eq.s32.totalorder %s17, 0
    %p122 = por %p120, %p121
    %p123 = scmp.ne.s32.totalorder %s111, %s112
    %p124 = scmp.eq.s32.totalorder %s18, 1
    %p125 = por %p123, %p124
    %p127 = scmp.ne.s32.totalorder %s112, %s126
    %p128 = scmp.eq.s32.totalorder %s18, 0
    %p129 = por %p127, %p128
    %s130 = ssub.s32 %s12, %s19
    %p131 = scmp.eq.s32.totalorder %s130, 0
    %s133 = sadd.s32 %s132, 1
    %s134 = scalar_select %p131, %s132, %s133
    %p137 = pneg %p131
    %p138 = scmp.eq.s32.totalorder %s12, 1
    %p139 = por %p137, %p138
    %p140 = scmp.ne.s32.totalorder %s132, %s135
    %p141 = scmp.eq.s32.totalorder %s12, 0
    %p142 = por %p140, %p141
    %p143 = scmp.ne.s32.totalorder %s132, %s135
    %p144 = scmp.eq.s32.totalorder %s17, 1
    %p145 = por %p143, %p144
    %p146 = scmp.ne.s32.totalorder %s135, %s136
    %p147 = scmp.eq.s32.totalorder %s17, 0
    %p148 = por %p146, %p147
    %p149 = scmp.ne.s32.totalorder %s135, %s136
    %p150 = scmp.eq.s32.totalorder %s18, 1
    %p151 = por %p149, %p150
    %p153 = scmp.ne.s32.totalorder %s136, %s152
    %p154 = scmp.eq.s32.totalorder %s18, 0
    %p155 = por %p153, %p154
    %p156 = scmp.le.s32.totalorder 1, %s12
    %p157 = scmp.lt.s32.totalorder %s12, 3
    %p158 = pnand %p156, %p157
    %p159 = pneg %p158
    // Predicated region
    $region9: #{tpu_custom_call.1} parent=5 // pred_check
      _
    $region10: #{tpu_custom_call.1} parent=5 // pred_check_branch
      %161 = sbr.rel (%p158) target = $region12
    $region11: #{tpu_custom_call.1} parent=5 // pred_region
      %s162 = ssub.s32 %s12, 1
      // Predicated region
      $region13: #{tpu_custom_call.1} parent=11 // pred_check
        %p163 = pneg %p59
      $region14: #{tpu_custom_call.1} parent=11 // pred_check_branch
        %165 = sbr.rel (%p163) target = $region16
      $region15: #{tpu_custom_call.1} parent=11 // pred_region
        _
      $region16: #{tpu_custom_call.1} parent=11 // pred_fallthru
        _
      // Predicated region
      $region17: #{tpu_custom_call.1} parent=11 // pred_check
        %p166 = pneg %p80
      $region18: #{tpu_custom_call.1} parent=11 // pred_check_branch
        %168 = sbr.rel (%p166) target = $region20
      $region19: #{tpu_custom_call.1} parent=11 // pred_region
        _
      $region20: #{tpu_custom_call.1} parent=11 // pred_fallthru
        _
      // Predicated region
      $region21: #{tpu_custom_call.1} parent=11 // pred_check
        %p169 = pneg %p101
      $region22: #{tpu_custom_call.1} parent=11 // pred_check_branch
        %171 = sbr.rel (%p169) target = $region24
      $region23: #{tpu_custom_call.1} parent=11 // pred_region
        _
      $region24: #{tpu_custom_call.1} parent=11 // pred_fallthru
        _
      // Predicated region
      $region25: #{tpu_custom_call.1} parent=11 // pred_check
        %p172 = pneg %p122
      $region26: #{tpu_custom_call.1} parent=11 // pred_check_branch
        %174 = sbr.rel (%p172) target = $region28
      $region27: #{tpu_custom_call.1} parent=11 // pred_region
        _
      $region28: #{tpu_custom_call.1} parent=11 // pred_fallthru
        _
    $region12: #{tpu_custom_call.1} parent=5 // pred_fallthru
      _
    %p175 = scmp.lt.s32.totalorder %s12, 2
    // Predicated region
    $region29: #{tpu_custom_call.1} parent=5 // pred_check
      %p176 = pneg %p175
    $region30: #{tpu_custom_call.1} parent=5 // pred_check_branch
      %178 = sbr.rel (%p176) target = $region32
    $region31: #{tpu_custom_call.1} parent=5 // pred_region
      // Predicated region
      $region33: #{tpu_custom_call.1} parent=31 // pred_check
        %p179 = pneg %p32
      $region34: #{tpu_custom_call.1} parent=31 // pred_check_branch
        %181 = sbr.rel (%p179) target = $region36
      $region35: #{tpu_custom_call.1} parent=31 // pred_region
        %s182 = smul.u32 32, %s12
        %p183 = scmp.lt.s32.totalorder %s182, 63
        %s184 = scalar_select %p183, %s182, 63
        %s185 = smul.addr %s184, 8
        %s186 = scalar_lea.vmem %s0, %s185
        %s187 = smul.u32 32, %s12
      $region36: #{tpu_custom_call.1} parent=31 // pred_fallthru
        _
    $region32: #{tpu_custom_call.1} parent=5 // pred_fallthru
      _
    %p188 = scmp.le.s32.totalorder 1, %s12
    %p189 = scmp.lt.s32.totalorder %s12, 3
    %p190 = pnand %p188, %p189
    %p191 = pneg %p190
    // Predicated region
    $region37: #{tpu_custom_call.1} parent=5 // pred_check
      _
    $region38: #{tpu_custom_call.1} parent=5 // pred_check_branch
      %193 = sbr.rel (%p190) target = $region40
    $region39: #{tpu_custom_call.1} parent=5 // pred_region
      %s194 = ssub.s32 %s12, 1
      %s195 = smul.u32 32, %s17
      %p196 = scmp.lt.s32.totalorder %s195, 63
      %s197 = scalar_select %p196, %s195, 63
      %s198 = smul.addr %s197, 8
      %s199 = scalar_lea.vmem %s0, %s198
      %p200 = pneg %p38
      %p201 = pneg %p35
      %p202 = pneg %p59
      %p203 = pneg %p56
      %p204 = pneg %p80
      %p205 = pneg %p77
      %p206 = pneg %p101
      %p207 = pneg %p98
      %p208 = pneg %p122
      %p209 = pneg %p119
      %p210 = pneg %p148
      %p211 = pneg %p145
      %s212 = smul.u32 32, %s17
      %p213 = scmp.lt.s32.totalorder %s212, 63
      %s214 = scalar_select %p213, %s212, 63
      %s215 = smul.addr %s214, 8
      %s216 = scalar_lea.vmem %s5, %s215
      %s217 = smul.u32 32, %s17
      %p218 = scmp.lt.s32.totalorder %s217, 63
      %s219 = scalar_select %p218, %s217, 63
      %s220 = smul.addr %s219, 8
      %s221 = scalar_lea.vmem %s0, %s220
      %s222 = smul.u32 32, %s17
      %s223 = smul.u32 32, %s17
      %p224 = scmp.lt.s32.totalorder %s223, 63
      %s225 = scalar_select %p224, %s223, 63
      %s226 = smul.addr %s225, 8
      %s227 = scalar_lea.vmem %s5, %s226
      %s228 = smul.u32 32, %s17
      %v229 = vld [vmem:[%s221] sm:$0xff]
      %v230 = vld [vmem:[%s221 + $0x8] sm:$0xff]
      %v231 = vld [vmem:[%s221 + $0x10] sm:$0xff]
      %v232 = vld [vmem:[%s221 + $0x18] sm:$0xff]
      %v233 = vld [vmem:[%s221 + $0x20] sm:$0xff]
      %v234 = vld [vmem:[%s221 + $0x28] sm:$0xff]
      %v235 = vld [vmem:[%s221 + $0x30] sm:$0xff]
      %v236 = vld [vmem:[%s221 + $0x38] sm:$0xff]
      %v237 = vld [vmem:[%s221 + $0x40] sm:$0xff]
      %v238 = vld [vmem:[%s221 + $0x48] sm:$0xff]
      %v239 = vld [vmem:[%s221 + $0x50] sm:$0xff]
      %v240 = vld [vmem:[%s221 + $0x58] sm:$0xff]
      %v241 = vld [vmem:[%s221 + $0x60] sm:$0xff]
      %v242 = vld [vmem:[%s221 + $0x68] sm:$0xff]
      %v243 = vld [vmem:[%s221 + $0x70] sm:$0xff]
      %v244 = vld [vmem:[%s221 + $0x78] sm:$0xff]
      %v245 = vld [vmem:[%s221 + $0x80] sm:$0xff]
      %v246 = vld [vmem:[%s221 + $0x88] sm:$0xff]
      %v247 = vld [vmem:[%s221 + $0x90] sm:$0xff]
      %v248 = vld [vmem:[%s221 + $0x98] sm:$0xff]
      %v249 = vld [vmem:[%s221 + $0xa0] sm:$0xff]
      %v250 = vld [vmem:[%s221 + $0xa8] sm:$0xff]
      %v251 = vld [vmem:[%s221 + $0xb0] sm:$0xff]
      %v252 = vld [vmem:[%s221 + $0xb8] sm:$0xff]
      %v253 = vld [vmem:[%s221 + $0xc0] sm:$0xff]
      %v254 = vld [vmem:[%s221 + $0xc8] sm:$0xff]
      %v255 = vld [vmem:[%s221 + $0xd0] sm:$0xff]
      %v256 = vld [vmem:[%s221 + $0xd8] sm:$0xff]
      %v257 = vld [vmem:[%s221 + $0xe0] sm:$0xff]
      %v258 = vld [vmem:[%s221 + $0xe8] sm:$0xff]
      %v259 = vld [vmem:[%s221 + $0xf0] sm:$0xff]
      %v260 = vld [vmem:[%s221 + $0xf8] sm:$0xff]
      %v261 = vld [vmem:[%s1] sm:$0xff]
      %v262 = vld [vmem:[%s1 + $0x8] sm:$0xff]
      %v263 = vld [vmem:[%s1 + $0x10] sm:$0xff]
      %v264 = vld [vmem:[%s1 + $0x18] sm:$0xff]
      %v265 = vld [vmem:[%s2] sm:$0x1]
      %v267 = vlaneseq
      %v268 = vshrl.u32 %v267, 7
      %v269 = vsub.s32 0, %v268
      %v270 = vrot.slane %v265, %v269
      %vm272 = vcmask 261120
      %v274 = vsel %vm272, %v229, 0
      %v277 = vsel %vm272, %v230, 0
      %v280 = vsel %vm272, %v231, 0
      %v283 = vsel %vm272, %v232, 0
      %v286 = vsel %vm272, %v233, 0
      %v289 = vsel %vm272, %v234, 0
      %v292 = vsel %vm272, %v235, 0
      %v295 = vsel %vm272, %v236, 0
      %v298 = vsel %vm272, %v237, 0
      %v301 = vsel %vm272, %v238, 0
      %v304 = vsel %vm272, %v239, 0
      %v307 = vsel %vm272, %v240, 0
      %v310 = vsel %vm272, %v241, 0
      %v313 = vsel %vm272, %v242, 0
      %v316 = vsel %vm272, %v243, 0
      %v319 = vsel %vm272, %v244, 0
      %v322 = vsel %vm272, %v245, 0
      %v325 = vsel %vm272, %v246, 0
      %v328 = vsel %vm272, %v247, 0
      %v331 = vsel %vm272, %v248, 0
      %v334 = vsel %vm272, %v249, 0
      %v337 = vsel %vm272, %v250, 0
      %v340 = vsel %vm272, %v251, 0
      %v343 = vsel %vm272, %v252, 0
      %v346 = vsel %vm272, %v253, 0
      %v349 = vsel %vm272, %v254, 0
      %v352 = vsel %vm272, %v255, 0
      %v355 = vsel %vm272, %v256, 0
      %v358 = vsel %vm272, %v257, 0
      %v361 = vsel %vm272, %v258, 0
      %v364 = vsel %vm272, %v259, 0
      %v367 = vsel %vm272, %v260, 0
      %369 = vmatprep.subr.mxu0 0.0
      %370 = vmatpush1.msra.mxu0 %v261
      %371 = vmatprep.subr.mxu0 0.0
      %372 = vmatpush1.msra.mxu0 %v262
      %373 = vmatprep.subr.mxu0 0.0
      %374 = vmatpush1.msra.mxu0 %v263
      %375 = vmatprep.subr.mxu0 0.0
      %376 = vmatpush1.msra.mxu0 %v264
      %377 = vmatprep.subr.mxu0 0.0
      %378 = vmatpush1.msra.mxu0 0.0
      %379 = vmatprep.subr.mxu0 0.0
      %380 = vmatpush1.msra.mxu0 0.0
      %381 = vmatprep.subr.mxu0 0.0
      %382 = vmatpush1.msra.mxu0 0.0
      %383 = vmatprep.subr.mxu0 0.0
      %384 = vmatpush1.msra.mxu0 0.0
      %385 = vmatprep.subr.mxu0 0.0
      %386 = vmatpush1.msra.mxu0 0.0
      %387 = vmatprep.subr.mxu0 0.0
      %388 = vmatpush1.msra.mxu0 0.0
      %389 = vmatprep.subr.mxu0 0.0
      %390 = vmatpush1.msra.mxu0 0.0
      %391 = vmatprep.subr.mxu0 0.0
      %392 = vmatpush1.msra.mxu0 0.0
      %393 = vmatprep.subr.mxu0 0.0
      %394 = vmatpush1.msra.mxu0 0.0
      %395 = vmatprep.subr.mxu0 0.0
      %396 = vmatpush1.msra.mxu0 0.0
      %397 = vmatprep.subr.mxu0 0.0
      %398 = vmatpush1.msra.mxu0 0.0
      %399 = vmatprep.subr.mxu0 0.0
      %400 = vmatpush1.msra.mxu0 0.0
      %401 = vmatprep.subr.mxu0 0.0
      %402 = vmatpush1.msra.mxu0 0.0
      %403 = vmatprep.subr.mxu0 0.0
      %404 = vmatpush1.msra.mxu0 0.0
      %405 = vmatprep.subr.mxu0 0.0
      %406 = vmatpush1.msra.mxu0 0.0
      %407 = vmatprep.subr.mxu0 0.0
      %408 = vmatpush1.msra.mxu0 0.0
      %409 = vmatprep.subr.mxu0 0.0
      %410 = vmatpush1.msra.mxu0 0.0
      %411 = vmatprep.subr.mxu0 0.0
      %412 = vmatpush1.msra.mxu0 0.0
      %413 = vmatprep.subr.mxu0 0.0
      %414 = vmatpush1.msra.mxu0 0.0
      %415 = vmatprep.subr.mxu0 0.0
      %416 = vmatpush1.msra.mxu0 0.0
      %417 = vmatprep.subr.mxu0 0.0
      %418 = vmatpush1.msra.mxu0 0.0
      %419 = vmatprep.subr.mxu0 0.0
      %420 = vmatpush1.msra.mxu0 0.0
      %421 = vmatprep.subr.mxu0 0.0
      %422 = vmatpush1.msra.mxu0 0.0
      %423 = vmatprep.subr.mxu0 0.0
      %424 = vmatpush1.msra.mxu0 0.0
      %425 = vmatprep.subr.mxu0 0.0
      %426 = vmatpush1.msra.mxu0 0.0
      %427 = vmatprep.subr.mxu0 0.0
      %428 = vmatpush1.msra.mxu0 0.0
      %429 = vmatprep.subr.mxu0 0.0
      %430 = vmatpush1.msra.mxu0 0.0
      %431 = vmatprep.subr.mxu0 0.0
      %432 = vmatpush1.msra.mxu0 0.0
      %433 = vmatprep.mubr.f32.mxu0 0.0
      %434 = vmatmul.mubr.f32.gmra.mrb[0].mxu0 %v274
      %v435 = vpop.f32.mrb[0].mxu0
      %v436 = vadd.f32 %v270, %v435
      %v437 = vpop.f32.mrb[0].mxu0
      %438 = vmatprep.mubr.f32.mxu0 0.0
      %439 = vmatmul.mubr.f32.gmra.mrb[0].mxu0 %v277
      %v440 = vpop.f32.mrb[0].mxu0
      %v441 = vadd.f32 %v270, %v440
      %v442 = vpop.f32.mrb[0].mxu0
      %443 = vmatprep.mubr.f32.mxu0 0.0
      %444 = vmatmul.mubr.f32.gmra.mrb[0].mxu0 %v280
      %v445 = vpop.f32.mrb[0].mxu0
      %v446 = vadd.f32 %v270, %v445
      %v447 = vpop.f32.mrb[0].mxu0
      %448 = vmatprep.mubr.f32.mxu0 0.0
      %449 = vmatmul.mubr.f32.gmra.mrb[0].mxu0 %v283
      %v450 = vpop.f32.mrb[0].mxu0
      %v451 = vadd.f32 %v270, %v450
      %v452 = vpop.f32.mrb[0].mxu0
      %453 = vmatprep.mubr.f32.mxu0 0.0
      %454 = vmatmul.mubr.f32.gmra.mrb[0].mxu0 %v286
      %v455 = vpop.f32.mrb[0].mxu0
      %v456 = vadd.f32 %v270, %v455
      %v457 = vpop.f32.mrb[0].mxu0
      %458 = vmatprep.mubr.f32.mxu0 0.0
      %459 = vmatmul.mubr.f32.gmra.mrb[0].mxu0 %v289
      %v460 = vpop.f32.mrb[0].mxu0
      %v461 = vadd.f32 %v270, %v460
      %v462 = vpop.f32.mrb[0].mxu0
      %463 = vmatprep.mubr.f32.mxu0 0.0
      %464 = vmatmul.mubr.f32.gmra.mrb[0].mxu0 %v292
      %v465 = vpop.f32.mrb[0].mxu0
      %v466 = vadd.f32 %v270, %v465
      %v467 = vpop.f32.mrb[0].mxu0
      %468 = vmatprep.mubr.f32.mxu0 0.0
      %469 = vmatmul.mubr.f32.gmra.mrb[0].mxu0 %v295
      %v470 = vpop.f32.mrb[0].mxu0
      %v471 = vadd.f32 %v270, %v470
      %v472 = vpop.f32.mrb[0].mxu0
      %473 = vmatprep.mubr.f32.mxu0 0.0
      %474 = vmatmul.mubr.f32.gmra.mrb[0].mxu0 %v298
      %v475 = vpop.f32.mrb[0].mxu0
      %v476 = vadd.f32 %v270, %v475
      %v477 = vpop.f32.mrb[0].mxu0
      %478 = vmatprep.mubr.f32.mxu0 0.0
      %479 = vmatmul.mubr.f32.gmra.mrb[0].mxu0 %v301
      %v480 = vpop.f32.mrb[0].mxu0
      %v481 = vadd.f32 %v270, %v480
      %v482 = vpop.f32.mrb[0].mxu0
      %483 = vmatprep.mubr.f32.mxu0 0.0
      %484 = vmatmul.mubr.f32.gmra.mrb[0].mxu0 %v304
      %v485 = vpop.f32.mrb[0].mxu0
      %v486 = vadd.f32 %v270, %v485
      %v487 = vpop.f32.mrb[0].mxu0
      %488 = vmatprep.mubr.f32.mxu0 0.0
      %489 = vmatmul.mubr.f32.gmra.mrb[0].mxu0 %v307
      %v490 = vpop.f32.mrb[0].mxu0
      %v491 = vadd.f32 %v270, %v490
      %v492 = vpop.f32.mrb[0].mxu0
      %493 = vmatprep.mubr.f32.mxu0 0.0
      %494 = vmatmul.mubr.f32.gmra.mrb[0].mxu0 %v310
      %v495 = vpop.f32.mrb[0].mxu0
      %v496 = vadd.f32 %v270, %v495
      %v497 = vpop.f32.mrb[0].mxu0
      %498 = vmatprep.mubr.f32.mxu0 0.0
      %499 = vmatmul.mubr.f32.gmra.mrb[0].mxu0 %v313
      %v500 = vpop.f32.mrb[0].mxu0
      %v501 = vadd.f32 %v270, %v500
      %v502 = vpop.f32.mrb[0].mxu0
      %503 = vmatprep.mubr.f32.mxu0 0.0
      %504 = vmatmul.mubr.f32.gmra.mrb[0].mxu0 %v316
      %v505 = vpop.f32.mrb[0].mxu0
      %v506 = vadd.f32 %v270, %v505
      %v507 = vpop.f32.mrb[0].mxu0
      %508 = vmatprep.mubr.f32.mxu0 0.0
      %509 = vmatmul.mubr.f32.gmra.mrb[0].mxu0 %v319
      %v510 = vpop.f32.mrb[0].mxu0
      %v511 = vadd.f32 %v270, %v510
      %v512 = vpop.f32.mrb[0].mxu0
      %513 = vmatprep.mubr.f32.mxu0 0.0
      %514 = vmatmul.mubr.f32.gmra.mrb[0].mxu0 %v322
      %v515 = vpop.f32.mrb[0].mxu0
      %v516 = vadd.f32 %v270, %v515
      %v517 = vpop.f32.mrb[0].mxu0
      %518 = vmatprep.mubr.f32.mxu0 0.0
      %519 = vmatmul.mubr.f32.gmra.mrb[0].mxu0 %v325
      %v520 = vpop.f32.mrb[0].mxu0
      %v521 = vadd.f32 %v270, %v520
      %v522 = vpop.f32.mrb[0].mxu0
      %523 = vmatprep.mubr.f32.mxu0 0.0
      %524 = vmatmul.mubr.f32.gmra.mrb[0].mxu0 %v328
      %v525 = vpop.f32.mrb[0].mxu0
      %v526 = vadd.f32 %v270, %v525
      %v527 = vpop.f32.mrb[0].mxu0
      %528 = vmatprep.mubr.f32.mxu0 0.0
      %529 = vmatmul.mubr.f32.gmra.mrb[0].mxu0 %v331
      %v530 = vpop.f32.mrb[0].mxu0
      %v531 = vadd.f32 %v270, %v530
      %v532 = vpop.f32.mrb[0].mxu0
      %533 = vmatprep.mubr.f32.mxu0 0.0
      %534 = vmatmul.mubr.f32.gmra.mrb[0].mxu0 %v334
      %v535 = vpop.f32.mrb[0].mxu0
      %v536 = vadd.f32 %v270, %v535
      %v537 = vpop.f32.mrb[0].mxu0
      %538 = vmatprep.mubr.f32.mxu0 0.0
      %539 = vmatmul.mubr.f32.gmra.mrb[0].mxu0 %v337
      %v540 = vpop.f32.mrb[0].mxu0
      %v541 = vadd.f32 %v270, %v540
      %v542 = vpop.f32.mrb[0].mxu0
      %543 = vmatprep.mubr.f32.mxu0 0.0
      %544 = vmatmul.mubr.f32.gmra.mrb[0].mxu0 %v340
      %v545 = vpop.f32.mrb[0].mxu0
      %v546 = vadd.f32 %v270, %v545
      %v547 = vpop.f32.mrb[0].mxu0
      %548 = vmatprep.mubr.f32.mxu0 0.0
      %549 = vmatmul.mubr.f32.gmra.mrb[0].mxu0 %v343
      %v550 = vpop.f32.mrb[0].mxu0
      %v551 = vadd.f32 %v270, %v550
      %v552 = vpop.f32.mrb[0].mxu0
      %553 = vmatprep.mubr.f32.mxu0 0.0
      %554 = vmatmul.mubr.f32.gmra.mrb[0].mxu0 %v346
      %v555 = vpop.f32.mrb[0].mxu0
      %v556 = vadd.f32 %v270, %v555
      %v557 = vpop.f32.mrb[0].mxu0
      %558 = vmatprep.mubr.f32.mxu0 0.0
      %559 = vmatmul.mubr.f32.gmra.mrb[0].mxu0 %v349
      %v560 = vpop.f32.mrb[0].mxu0
      %v561 = vadd.f32 %v270, %v560
      %v562 = vpop.f32.mrb[0].mxu0
      %563 = vmatprep.mubr.f32.mxu0 0.0
      %564 = vmatmul.mubr.f32.gmra.mrb[0].mxu0 %v352
      %v565 = vpop.f32.mrb[0].mxu0
      %v566 = vadd.f32 %v270, %v565
      %v567 = vpop.f32.mrb[0].mxu0
      %568 = vmatprep.mubr.f32.mxu0 0.0
      %569 = vmatmul.mubr.f32.gmra.mrb[0].mxu0 %v355
      %v570 = vpop.f32.mrb[0].mxu0
      %v571 = vadd.f32 %v270, %v570
      %v572 = vpop.f32.mrb[0].mxu0
      %573 = vmatprep.mubr.f32.mxu0 0.0
      %574 = vmatmul.mubr.f32.gmra.mrb[0].mxu0 %v358
      %v575 = vpop.f32.mrb[0].mxu0
      %v576 = vadd.f32 %v270, %v575
      %v577 = vpop.f32.mrb[0].mxu0
      %578 = vmatprep.mubr.f32.mxu0 0.0
      %579 = vmatmul.mubr.f32.gmra.mrb[0].mxu0 %v361
      %v580 = vpop.f32.mrb[0].mxu0
      %v581 = vadd.f32 %v270, %v580
      %v582 = vpop.f32.mrb[0].mxu0
      %583 = vmatprep.mubr.f32.mxu0 0.0
      %584 = vmatmul.mubr.f32.gmra.mrb[0].mxu0 %v364
      %v585 = vpop.f32.mrb[0].mxu0
      %v586 = vadd.f32 %v270, %v585
      %v587 = vpop.f32.mrb[0].mxu0
      %588 = vmatprep.mubr.f32.mxu0 0.0
      %589 = vmatmul.mubr.f32.gmra.mrb[0].mxu0 %v367
      %v590 = vpop.f32.mrb[0].mxu0
      %v591 = vadd.f32 %v270, %v590
      %v592 = vpop.f32.mrb[0].mxu0
      %593 = vdwg.mxu0
      %v594 = vxor.u32 %v436, 2147483648
      %v595 = vxor.u32 %v441, 2147483648
      %v596 = vxor.u32 %v446, 2147483648
      %v597 = vxor.u32 %v451, 2147483648
      %v598 = vxor.u32 %v456, 2147483648
      %v599 = vxor.u32 %v461, 2147483648
      %v600 = vxor.u32 %v466, 2147483648
      %v601 = vxor.u32 %v471, 2147483648
      %v602 = vxor.u32 %v476, 2147483648
      %v603 = vxor.u32 %v481, 2147483648
      %v604 = vxor.u32 %v486, 2147483648
      %v605 = vxor.u32 %v491, 2147483648
      %v606 = vxor.u32 %v496, 2147483648
      %v607 = vxor.u32 %v501, 2147483648
      %v608 = vxor.u32 %v506, 2147483648
      %v609 = vxor.u32 %v511, 2147483648
      %v610 = vxor.u32 %v516, 2147483648
      %v611 = vxor.u32 %v521, 2147483648
      %v612 = vxor.u32 %v526, 2147483648
      %v613 = vxor.u32 %v531, 2147483648
      %v614 = vxor.u32 %v536, 2147483648
      %v615 = vxor.u32 %v541, 2147483648
      %v616 = vxor.u32 %v546, 2147483648
      %v617 = vxor.u32 %v551, 2147483648
      %v618 = vxor.u32 %v556, 2147483648
      %v619 = vxor.u32 %v561, 2147483648
      %v620 = vxor.u32 %v566, 2147483648
      %v621 = vxor.u32 %v571, 2147483648
      %v622 = vxor.u32 %v576, 2147483648
      %v623 = vxor.u32 %v581, 2147483648
      %v624 = vxor.u32 %v586, 2147483648
      %v625 = vxor.u32 %v591, 2147483648
      %v626 = vmul.f32 %v594, 1.442695
      %v627 = vpow.pop %v626
      %v628 = vmul.f32 %v595, 1.442695
      %v629 = vpow.pop %v628
      %v630 = vmul.f32 %v596, 1.442695
      %v631 = vpow.pop %v630
      %v632 = vmul.f32 %v597, 1.442695
      %v633 = vpow.pop %v632
      %v634 = vmul.f32 %v598, 1.442695
      %v635 = vpow.pop %v634
      %v636 = vmul.f32 %v599, 1.442695
      %v637 = vpow.pop %v636
      %v638 = vmul.f32 %v600, 1.442695
      %v639 = vpow.pop %v638
      %v640 = vmul.f32 %v601, 1.442695
      %v641 = vpow.pop %v640
      %v642 = vmul.f32 %v602, 1.442695
      %v643 = vpow.pop %v642
      %v644 = vmul.f32 %v603, 1.442695
      %v645 = vpow.pop %v644
      %v646 = vmul.f32 %v604, 1.442695
      %v647 = vpow.pop %v646
      %v648 = vmul.f32 %v605, 1.442695
      %v649 = vpow.pop %v648
      %v650 = vmul.f32 %v606, 1.442695
      %v651 = vpow.pop %v650
      %v652 = vmul.f32 %v607, 1.442695
      %v653 = vpow.pop %v652
      %v654 = vmul.f32 %v608, 1.442695
      %v655 = vpow.pop %v654
      %v656 = vmul.f32 %v609, 1.442695
      %v657 = vpow.pop %v656
      %v658 = vmul.f32 %v610, 1.442695
      %v659 = vpow.pop %v658
      %v660 = vmul.f32 %v611, 1.442695
      %v661 = vpow.pop %v660
      %v662 = vmul.f32 %v612, 1.442695
      %v663 = vpow.pop %v662
      %v664 = vmul.f32 %v613, 1.442695
      %v665 = vpow.pop %v664
      %v666 = vmul.f32 %v614, 1.442695
      %v667 = vpow.pop %v666
      %v668 = vmul.f32 %v615, 1.442695
      %v669 = vpow.pop %v668
      %v670 = vmul.f32 %v616, 1.442695
      %v671 = vpow.pop %v670
      %v672 = vmul.f32 %v617, 1.442695
      %v673 = vpow.pop %v672
      %v674 = vmul.f32 %v618, 1.442695
      %v675 = vpow.pop %v674
      %v676 = vmul.f32 %v619, 1.442695
      %v677 = vpow.pop %v676
      %v678 = vmul.f32 %v620, 1.442695
      %v679 = vpow.pop %v678
      %v680 = vmul.f32 %v621, 1.442695
      %v681 = vpow.pop %v680
      %v682 = vmul.f32 %v622, 1.442695
      %v683 = vpow.pop %v682
      %v684 = vmul.f32 %v623, 1.442695
      %v685 = vpow.pop %v684
      %v686 = vmul.f32 %v624, 1.442695
      %v687 = vpow.pop %v686
      %v688 = vmul.f32 %v625, 1.442695
      %v689 = vpow.pop %v688
      %v690 = vadd.f32 %v627, 1.0
      %v691 = vadd.f32 %v629, 1.0
      %v692 = vadd.f32 %v631, 1.0
      %v693 = vadd.f32 %v633, 1.0
      %v694 = vadd.f32 %v635, 1.0
      %v695 = vadd.f32 %v637, 1.0
      %v696 = vadd.f32 %v639, 1.0
      %v697 = vadd.f32 %v641, 1.0
      %v698 = vadd.f32 %v643, 1.0
      %v699 = vadd.f32 %v645, 1.0
      %v700 = vadd.f32 %v647, 1.0
      %v701 = vadd.f32 %v649, 1.0
      %v702 = vadd.f32 %v651, 1.0
      %v703 = vadd.f32 %v653, 1.0
      %v704 = vadd.f32 %v655, 1.0
      %v705 = vadd.f32 %v657, 1.0
      %v706 = vadd.f32 %v659, 1.0
      %v707 = vadd.f32 %v661, 1.0
      %v708 = vadd.f32 %v663, 1.0
      %v709 = vadd.f32 %v665, 1.0
      %v710 = vadd.f32 %v667, 1.0
      %v711 = vadd.f32 %v669, 1.0
      %v712 = vadd.f32 %v671, 1.0
      %v713 = vadd.f32 %v673, 1.0
      %v714 = vadd.f32 %v675, 1.0
      %v715 = vadd.f32 %v677, 1.0
      %v716 = vadd.f32 %v679, 1.0
      %v717 = vadd.f32 %v681, 1.0
      %v718 = vadd.f32 %v683, 1.0
      %v719 = vadd.f32 %v685, 1.0
      %v720 = vadd.f32 %v687, 1.0
      %v721 = vadd.f32 %v689, 1.0
      %v722 = vrcp.pop %v690
      %v723 = vmul.f32 1.0, %v722
      %v724 = vrcp.pop %v691
      %v725 = vmul.f32 1.0, %v724
      %v726 = vrcp.pop %v692
      %v727 = vmul.f32 1.0, %v726
      %v728 = vrcp.pop %v693
      %v729 = vmul.f32 1.0, %v728
      %v730 = vrcp.pop %v694
      %v731 = vmul.f32 1.0, %v730
      %v732 = vrcp.pop %v695
      %v733 = vmul.f32 1.0, %v732
      %v734 = vrcp.pop %v696
      %v735 = vmul.f32 1.0, %v734
      %v736 = vrcp.pop %v697
      %v737 = vmul.f32 1.0, %v736
      %v738 = vrcp.pop %v698
      %v739 = vmul.f32 1.0, %v738
      %v740 = vrcp.pop %v699
      %v741 = vmul.f32 1.0, %v740
      %v742 = vrcp.pop %v700
      %v743 = vmul.f32 1.0, %v742
      %v744 = vrcp.pop %v701
      %v745 = vmul.f32 1.0, %v744
      %v746 = vrcp.pop %v702
      %v747 = vmul.f32 1.0, %v746
      %v748 = vrcp.pop %v703
      %v749 = vmul.f32 1.0, %v748
      %v750 = vrcp.pop %v704
      %v751 = vmul.f32 1.0, %v750
      %v752 = vrcp.pop %v705
      %v753 = vmul.f32 1.0, %v752
      %v754 = vrcp.pop %v706
      %v755 = vmul.f32 1.0, %v754
      %v756 = vrcp.pop %v707
      %v757 = vmul.f32 1.0, %v756
      %v758 = vrcp.pop %v708
      %v759 = vmul.f32 1.0, %v758
      %v760 = vrcp.pop %v709
      %v761 = vmul.f32 1.0, %v760
      %v762 = vrcp.pop %v710
      %v763 = vmul.f32 1.0, %v762
      %v764 = vrcp.pop %v711
      %v765 = vmul.f32 1.0, %v764
      %v766 = vrcp.pop %v712
      %v767 = vmul.f32 1.0, %v766
      %v768 = vrcp.pop %v713
      %v769 = vmul.f32 1.0, %v768
      %v770 = vrcp.pop %v714
      %v771 = vmul.f32 1.0, %v770
      %v772 = vrcp.pop %v715
      %v773 = vmul.f32 1.0, %v772
      %v774 = vrcp.pop %v716
      %v775 = vmul.f32 1.0, %v774
      %v776 = vrcp.pop %v717
      %v777 = vmul.f32 1.0, %v776
      %v778 = vrcp.pop %v718
      %v779 = vmul.f32 1.0, %v778
      %v780 = vrcp.pop %v719
      %v781 = vmul.f32 1.0, %v780
      %v782 = vrcp.pop %v720
      %v783 = vmul.f32 1.0, %v782
      %v784 = vrcp.pop %v721
      %v785 = vmul.f32 1.0, %v784
      %v786 = vmul.f32 %v436, %v723
      %v787 = vmul.f32 %v441, %v725
      %v788 = vmul.f32 %v446, %v727
      %v789 = vmul.f32 %v451, %v729
      %v790 = vmul.f32 %v456, %v731
      %v791 = vmul.f32 %v461, %v733
      %v792 = vmul.f32 %v466, %v735
      %v793 = vmul.f32 %v471, %v737
      %v794 = vmul.f32 %v476, %v739
      %v795 = vmul.f32 %v481, %v741
      %v796 = vmul.f32 %v486, %v743
      %v797 = vmul.f32 %v491, %v745
      %v798 = vmul.f32 %v496, %v747
      %v799 = vmul.f32 %v501, %v749
      %v800 = vmul.f32 %v506, %v751
      %v801 = vmul.f32 %v511, %v753
      %v802 = vmul.f32 %v516, %v755
      %v803 = vmul.f32 %v521, %v757
      %v804 = vmul.f32 %v526, %v759
      %v805 = vmul.f32 %v531, %v761
      %v806 = vmul.f32 %v536, %v763
      %v807 = vmul.f32 %v541, %v765
      %v808 = vmul.f32 %v546, %v767
      %v809 = vmul.f32 %v551, %v769
      %v810 = vmul.f32 %v556, %v771
      %v811 = vmul.f32 %v561, %v773
      %v812 = vmul.f32 %v566, %v775
      %v813 = vmul.f32 %v571, %v777
      %v814 = vmul.f32 %v576, %v779
      %v815 = vmul.f32 %v581, %v781
      %v816 = vmul.f32 %v586, %v783
      %v817 = vmul.f32 %v591, %v785
      %v818 = vld [vmem:[%s3] sm:$0x1]
      %v820 = vlaneseq
      %v821 = vshrl.u32 %v820, 7
      %v822 = vsub.s32 0, %v821
      %v823 = vrot.slane %v818, %v822
      %v825 = vmul.f32 %v786, %v823
      %v826 = vmul.f32 %v787, %v823
      %v827 = vmul.f32 %v788, %v823
      %v828 = vmul.f32 %v789, %v823
      %v829 = vmul.f32 %v790, %v823
      %v830 = vmul.f32 %v791, %v823
      %v831 = vmul.f32 %v792, %v823
      %v832 = vmul.f32 %v793, %v823
      %v833 = vmul.f32 %v794, %v823
      %v834 = vmul.f32 %v795, %v823
      %v835 = vmul.f32 %v796, %v823
      %v836 = vmul.f32 %v797, %v823
      %v837 = vmul.f32 %v798, %v823
      %v838 = vmul.f32 %v799, %v823
      %v839 = vmul.f32 %v800, %v823
      %v840 = vmul.f32 %v801, %v823
      %v841 = vmul.f32 %v802, %v823
      %v842 = vmul.f32 %v803, %v823
      %v843 = vmul.f32 %v804, %v823
      %v844 = vmul.f32 %v805, %v823
      %v845 = vmul.f32 %v806, %v823
      %v846 = vmul.f32 %v807, %v823
      %v847 = vmul.f32 %v808, %v823
      %v848 = vmul.f32 %v809, %v823
      %v849 = vmul.f32 %v810, %v823
      %v850 = vmul.f32 %v811, %v823
      %v851 = vmul.f32 %v812, %v823
      %v852 = vmul.f32 %v813, %v823
      %v853 = vmul.f32 %v814, %v823
      %v854 = vmul.f32 %v815, %v823
      %v855 = vmul.f32 %v816, %v823
      %v856 = vmul.f32 %v817, %v823
      %vm857 = vcmask 523264
      %v858 = vsel %vm857, %v825, 0.0
      %859 = vadd.xlane.f32.xlu0 %v858
      %v860 = vpop.xlane.xlu0 %859
      %v861 = vsel %vm857, %v826, 0.0
      %862 = vadd.xlane.f32.xlu0 %v861
      %v863 = vpop.xlane.xlu0 %862
      %v864 = vsel %vm857, %v827, 0.0
      %865 = vadd.xlane.f32.xlu0 %v864
      %v866 = vpop.xlane.xlu0 %865
      %v867 = vsel %vm857, %v828, 0.0
      %868 = vadd.xlane.f32.xlu0 %v867
      %v869 = vpop.xlane.xlu0 %868
      %v870 = vsel %vm857, %v829, 0.0
      %871 = vadd.xlane.f32.xlu0 %v870
      %v872 = vpop.xlane.xlu0 %871
      %v873 = vsel %vm857, %v830, 0.0
      %874 = vadd.xlane.f32.xlu0 %v873
      %v875 = vpop.xlane.xlu0 %874
      %v876 = vsel %vm857, %v831, 0.0
      %877 = vadd.xlane.f32.xlu0 %v876
      %v878 = vpop.xlane.xlu0 %877
      %v879 = vsel %vm857, %v832, 0.0
      %880 = vadd.xlane.f32.xlu0 %v879
      %v881 = vpop.xlane.xlu0 %880
      %v882 = vsel %vm857, %v833, 0.0
      %883 = vadd.xlane.f32.xlu0 %v882
      %v884 = vpop.xlane.xlu0 %883
      %v885 = vsel %vm857, %v834, 0.0
      %886 = vadd.xlane.f32.xlu0 %v885
      %v887 = vpop.xlane.xlu0 %886
      %v888 = vsel %vm857, %v835, 0.0
      %889 = vadd.xlane.f32.xlu0 %v888
      %v890 = vpop.xlane.xlu0 %889
      %v891 = vsel %vm857, %v836, 0.0
      %892 = vadd.xlane.f32.xlu0 %v891
      %v893 = vpop.xlane.xlu0 %892
      %v894 = vsel %vm857, %v837, 0.0
      %895 = vadd.xlane.f32.xlu0 %v894
      %v896 = vpop.xlane.xlu0 %895
      %v897 = vsel %vm857, %v838, 0.0
      %898 = vadd.xlane.f32.xlu0 %v897
      %v899 = vpop.xlane.xlu0 %898
      %v900 = vsel %vm857, %v839, 0.0
      %901 = vadd.xlane.f32.xlu0 %v900
      %v902 = vpop.xlane.xlu0 %901
      %v903 = vsel %vm857, %v840, 0.0
      %904 = vadd.xlane.f32.xlu0 %v903
      %v905 = vpop.xlane.xlu0 %904
      %v906 = vsel %vm857, %v841, 0.0
      %907 = vadd.xlane.f32.xlu0 %v906
      %v908 = vpop.xlane.xlu0 %907
      %v909 = vsel %vm857, %v842, 0.0
      %910 = vadd.xlane.f32.xlu0 %v909
      %v911 = vpop.xlane.xlu0 %910
      %v912 = vsel %vm857, %v843, 0.0
      %913 = vadd.xlane.f32.xlu0 %v912
      %v914 = vpop.xlane.xlu0 %913
      %v915 = vsel %vm857, %v844, 0.0
      %916 = vadd.xlane.f32.xlu0 %v915
      %v917 = vpop.xlane.xlu0 %916
      %v918 = vsel %vm857, %v845, 0.0
      %919 = vadd.xlane.f32.xlu0 %v918
      %v920 = vpop.xlane.xlu0 %919
      %v921 = vsel %vm857, %v846, 0.0
      %922 = vadd.xlane.f32.xlu0 %v921
      %v923 = vpop.xlane.xlu0 %922
      %v924 = vsel %vm857, %v847, 0.0
      %925 = vadd.xlane.f32.xlu0 %v924
      %v926 = vpop.xlane.xlu0 %925
      %v927 = vsel %vm857, %v848, 0.0
      %928 = vadd.xlane.f32.xlu0 %v927
      %v929 = vpop.xlane.xlu0 %928
      %v930 = vsel %vm857, %v849, 0.0
      %931 = vadd.xlane.f32.xlu0 %v930
      %v932 = vpop.xlane.xlu0 %931
      %v933 = vsel %vm857, %v850, 0.0
      %934 = vadd.xlane.f32.xlu0 %v933
      %v935 = vpop.xlane.xlu0 %934
      %v936 = vsel %vm857, %v851, 0.0
      %937 = vadd.xlane.f32.xlu0 %v936
      %v938 = vpop.xlane.xlu0 %937
      %v939 = vsel %vm857, %v852, 0.0
      %940 = vadd.xlane.f32.xlu0 %v939
      %v941 = vpop.xlane.xlu0 %940
      %v942 = vsel %vm857, %v853, 0.0
      %943 = vadd.xlane.f32.xlu0 %v942
      %v944 = vpop.xlane.xlu0 %943
      %v945 = vsel %vm857, %v854, 0.0
      %946 = vadd.xlane.f32.xlu0 %v945
      %v947 = vpop.xlane.xlu0 %946
      %v948 = vsel %vm857, %v855, 0.0
      %949 = vadd.xlane.f32.xlu0 %v948
      %v950 = vpop.xlane.xlu0 %949
      %v951 = vsel %vm857, %v856, 0.0
      %952 = vadd.xlane.f32.xlu0 %v951
      %v953 = vpop.xlane.xlu0 %952
      %s954 = sld [smem:[#allocation2]]
      %v955 = vstv %s954
      %v956 = vadd.f32 %v860, %v955
      %v957 = vadd.f32 %v863, %v955
      %v958 = vadd.f32 %v866, %v955
      %v959 = vadd.f32 %v869, %v955
      %v960 = vadd.f32 %v872, %v955
      %v961 = vadd.f32 %v875, %v955
      %v962 = vadd.f32 %v878, %v955
      %v963 = vadd.f32 %v881, %v955
      %v964 = vadd.f32 %v884, %v955
      %v965 = vadd.f32 %v887, %v955
      %v966 = vadd.f32 %v890, %v955
      %v967 = vadd.f32 %v893, %v955
      %v968 = vadd.f32 %v896, %v955
      %v969 = vadd.f32 %v899, %v955
      %v970 = vadd.f32 %v902, %v955
      %v971 = vadd.f32 %v905, %v955
      %v972 = vadd.f32 %v908, %v955
      %v973 = vadd.f32 %v911, %v955
      %v974 = vadd.f32 %v914, %v955
      %v975 = vadd.f32 %v917, %v955
      %v976 = vadd.f32 %v920, %v955
      %v977 = vadd.f32 %v923, %v955
      %v978 = vadd.f32 %v926, %v955
      %v979 = vadd.f32 %v929, %v955
      %v980 = vadd.f32 %v932, %v955
      %v981 = vadd.f32 %v935, %v955
      %v982 = vadd.f32 %v938, %v955
      %v983 = vadd.f32 %v941, %v955
      %v984 = vadd.f32 %v944, %v955
      %v985 = vadd.f32 %v947, %v955
      %v986 = vadd.f32 %v950, %v955
      %v987 = vadd.f32 %v953, %v955
      %vm988 = vcmask 7168
      %989 = vst.msk [vmem:[%s227] sm:$0xff] %vm988, %v956
      %990 = vst.msk [vmem:[%s227 + $0x8] sm:$0xff] %vm988, %v957
      %991 = vst.msk [vmem:[%s227 + $0x10] sm:$0xff] %vm988, %v958
      %992 = vst.msk [vmem:[%s227 + $0x18] sm:$0xff] %vm988, %v959
      %993 = vst.msk [vmem:[%s227 + $0x20] sm:$0xff] %vm988, %v960
      %994 = vst.msk [vmem:[%s227 + $0x28] sm:$0xff] %vm988, %v961
      %995 = vst.msk [vmem:[%s227 + $0x30] sm:$0xff] %vm988, %v962
      %996 = vst.msk [vmem:[%s227 + $0x38] sm:$0xff] %vm988, %v963
      %997 = vst.msk [vmem:[%s227 + $0x40] sm:$0xff] %vm988, %v964
      %998 = vst.msk [vmem:[%s227 + $0x48] sm:$0xff] %vm988, %v965
      %999 = vst.msk [vmem:[%s227 + $0x50] sm:$0xff] %vm988, %v966
      %1000 = vst.msk [vmem:[%s227 + $0x58] sm:$0xff] %vm988, %v967
      %1001 = vst.msk [vmem:[%s227 + $0x60] sm:$0xff] %vm988, %v968
      %1002 = vst.msk [vmem:[%s227 + $0x68] sm:$0xff] %vm988, %v969
      %1003 = vst.msk [vmem:[%s227 + $0x70] sm:$0xff] %vm988, %v970
      %1004 = vst.msk [vmem:[%s227 + $0x78] sm:$0xff] %vm988, %v971
      %1005 = vst.msk [vmem:[%s227 + $0x80] sm:$0xff] %vm988, %v972
      %1006 = vst.msk [vmem:[%s227 + $0x88] sm:$0xff] %vm988, %v973
      %1007 = vst.msk [vmem:[%s227 + $0x90] sm:$0xff] %vm988, %v974
      %1008 = vst.msk [vmem:[%s227 + $0x98] sm:$0xff] %vm988, %v975
      %1009 = vst.msk [vmem:[%s227 + $0xa0] sm:$0xff] %vm988, %v976
      %1010 = vst.msk [vmem:[%s227 + $0xa8] sm:$0xff] %vm988, %v977
      %1011 = vst.msk [vmem:[%s227 + $0xb0] sm:$0xff] %vm988, %v978
      %1012 = vst.msk [vmem:[%s227 + $0xb8] sm:$0xff] %vm988, %v979
      %1013 = vst.msk [vmem:[%s227 + $0xc0] sm:$0xff] %vm988, %v980
      %1014 = vst.msk [vmem:[%s227 + $0xc8] sm:$0xff] %vm988, %v981
      %1015 = vst.msk [vmem:[%s227 + $0xd0] sm:$0xff] %vm988, %v982
      %1016 = vst.msk [vmem:[%s227 + $0xd8] sm:$0xff] %vm988, %v983
      %1017 = vst.msk [vmem:[%s227 + $0xe0] sm:$0xff] %vm988, %v984
      %1018 = vst.msk [vmem:[%s227 + $0xe8] sm:$0xff] %vm988, %v985
      %1019 = vst.msk [vmem:[%s227 + $0xf0] sm:$0xff] %vm988, %v986
      %1020 = vst.msk [vmem:[%s227 + $0xf8] sm:$0xff] %vm988, %v987
      %s1021 = smul.u32 32, %s17
      %p1022 = scmp.lt.s32.totalorder %s1021, 63
      %s1023 = scalar_select %p1022, %s1021, 63
      %s1024 = smul.addr %s1023, 8
      %s1025 = scalar_lea.vmem %s5, %s1024
      // Predicated region
      $region41: #{tpu_custom_call.1} parent=39 // pred_check
        %p1026 = pneg %p145
      $region42: #{tpu_custom_call.1} parent=39 // pred_check_branch
        %1028 = sbr.rel (%p1026) target = $region44
      $region43: #{tpu_custom_call.1} parent=39 // pred_region
        %s1029 = smul.u32 32, %s17
      $region44: #{tpu_custom_call.1} parent=39 // pred_fallthru
        _
    $region40: #{tpu_custom_call.1} parent=5 // pred_fallthru
      _
    %p1030 = scmp.le.s32.totalorder 2, %s12
    // Predicated region
    $region45: #{tpu_custom_call.1} parent=5 // pred_check
      %p1031 = pneg %p1030
    $region46: #{tpu_custom_call.1} parent=5 // pred_check_branch
      %1033 = sbr.rel (%p1031) target = $region48
    $region47: #{tpu_custom_call.1} parent=5 // pred_region
      %s1034 = ssub.s32 %s12, 2
      // Predicated region
      $region49: #{tpu_custom_call.1} parent=47 // pred_check
        %p1035 = pneg %p151
      $region50: #{tpu_custom_call.1} parent=47 // pred_check_branch
        %1037 = sbr.rel (%p1035) target = $region52
      $region51: #{tpu_custom_call.1} parent=47 // pred_region
        %s1038 = smul.u32 32, %s18
        %p1039 = scmp.lt.s32.totalorder %s1038, 63
        %s1040 = scalar_select %p1039, %s1038, 63
        %s1041 = smul.addr %s1040, 8
        %s1042 = scalar_lea.vmem %s5, %s1041
      $region52: #{tpu_custom_call.1} parent=47 // pred_fallthru
        _
    $region48: #{tpu_custom_call.1} parent=5 // pred_fallthru
      _
  $region6: #{tpu_custom_call.1} parent=0 // loop_footer
    %s16 = sadd.s32 1, %s12
  $region7: #{tpu_custom_call.1} parent=0 // loop_footer_branch
    %11 = sbr.rel target = $region3
  $region8: #{tpu_custom_call.1} parent=0 // loop_exit
    _

</llo_original>
